<compile_context>
chip_gen: v7x
topology: tpu7x:2x2x1
jax: 0.10.0
libtpu: 0.0.40
codegen_flags: <defaults>
</compile_context>

<pallas_src>
import jax
import jax.numpy as jnp
from jax import lax
from jax.experimental import pallas as pl
from jax.experimental.pallas import tpu as pltpu


def _moco_head_kernel(x_ref, w1_ref, b1_ref, w2_ref, b2_ref, o_ref):
    # x_ref: (TN, C, HW) tile in native NCHW layout (HW flattened -> lane-dense).
    # AdaptiveAvgPool2d((1,1)) is a cross-lane (XLU) sum over HW; the XLU is otherwise
    # idle here and the 1/(H*W) scale is folded into w1. Accumulate in f32 (the input
    # may be bf16; v5e has no bf16 VPU, so upcast before the reduce).
    pooled = jnp.sum(x_ref[...].astype(jnp.float32), axis=-1)            # (TN, C)

    # fc1 + ReLU (MXU, f32 accumulate)
    h = jnp.dot(pooled, w1_ref[...], preferred_element_type=jnp.float32)
    h = jnp.maximum(h + b1_ref[...], 0.0)                                # (TN, F1)

    # fc2
    y = jnp.dot(h, w2_ref[...], preferred_element_type=jnp.float32)
    y = y + b2_ref[...]                                                  # (TN, F2)

    # F.normalize(p=2, dim=1): y / max(||y||, 1e-12) == y * rsqrt(max(||y||^2, 1e-24)).
    # rsqrt rides the EUP slot instead of a VPU sqrt + divide.
    sq = jnp.sum(y * y, axis=-1, keepdims=True)                          # (TN, 1)
    o_ref[...] = y * lax.rsqrt(jnp.maximum(sq, 1e-24))


def _round_up(x, m):
    return ((x + m - 1) // m) * m


def _vmem_row_bytes(c, hw, f1, f2, x_itemsize):
    """Per-N-row and resident VMEM footprints, including sublane/lane padding."""
    sub_x = 16 if x_itemsize == 2 else 8                  # bf16 packs 2 rows/sublane
    x_row = _round_up(c, sub_x) * _round_up(hw, 128) * x_itemsize
    out_row = _round_up(f2, 128) * 4
    # f32 intermediates (pooled C, h F1, y F2) that live in VMEM/vregs per row.
    inter_row = (_round_up(c, 128) + _round_up(f1, 128) + _round_up(f2, 128)) * 4
    # Resident weights / biases (assume double-buffered to stay conservative).
    resident = 2 * 4 * (
        _round_up(c, 8) * _round_up(f1, 128)
        + _round_up(f1, 8) * _round_up(f2, 128)
        + 8 * _round_up(f1, 128)
        + 8 * _round_up(f2, 128)
    )
    return x_row, out_row, inter_row, resident


def _pick_tile_n(n, c, hw, f1, f2, x_itemsize, budget_bytes, *, min_grid_steps=2):
    """Largest N-tile whose (padded, double-buffered) tiles fit the VMEM budget."""
    x_row, out_row, inter_row, resident = _vmem_row_bytes(c, hw, f1, f2, x_itemsize)
    per_row = 2 * (x_row + out_row) + inter_row           # x/out tiles double-buffered
    avail = max(budget_bytes - resident - (2 << 20), 8 * per_row)
    tn = max(8, avail // per_row)
    # Align the matmul M dim with the MXU when the tile is big enough.
    align = 256 if tn >= 256 else (128 if tn >= 128 else 8)
    tn = max(8, (tn // align) * align)
    n_up = _round_up(n, 8)
    # Keep >= min_grid_steps grid steps when N allows, so dual-TC chips (v7x) get
    # work on both cores; this is neutral on single-TC v5e/v6e.
    if min_grid_steps > 1 and n_up > 8 * min_grid_steps:
        cap = _round_up(pl.cdiv(n_up, min_grid_steps), 8)
        tn = max(8, min(tn, cap))
    return min(tn, n_up)


def _vmem_capacity_bytes():
    try:
        return int(pltpu.get_tpu_info().vmem_capacity_bytes)
    except Exception:
        return 64 << 20                                   # conservative (v7x per-TC)


def moco_head_forward(x_nchw, w1, b1, w2, b2, *, vmem_budget_bytes=None,
                      stream_dtype=None):
    """x_nchw: (N, C, H, W). Returns (N, fc_out) float32 with L2-normalized rows.

    Equivalent to MoCoHead.forward with num_convs=0, num_fcs=2, spatial_type='avg',
    with_norm=True, dropout_ratio=0. If `stream_dtype` is given (e.g. jnp.bfloat16),
    x is cast before the kernel; otherwise it streams in its native dtype (no extra
    wrapper HBM pass — a bf16 backbone output is streamed as bf16 for free).
    """
    N, C, H, W = x_nchw.shape
    HW = H * W
    F1 = w1.shape[1]
    F2 = w2.shape[1]

    x = x_nchw
    if stream_dtype is not None and x.dtype != jnp.dtype(stream_dtype):
        x = x.astype(stream_dtype)
    x_itemsize = jnp.dtype(x.dtype).itemsize
    # Native layout: contiguous reshape only (no HBM round-trip).
    x = x.reshape(N, C, HW)

    # Fold the 1/(H*W) pooling scale into w1 (rides into the matmul for free).
    w1_scaled = w1.astype(jnp.float32) * (1.0 / HW)
    w2_f = w2.astype(jnp.float32)
    b1_2d = b1.reshape(1, F1).astype(jnp.float32)
    b2_2d = b2.reshape(1, F2).astype(jnp.float32)

    # Per-generation VMEM budget: 64 MiB/TC on v7x, 128 MiB on v5e/v6e, with headroom
    # for Mosaic internal scratch.
    vmem_cap = _vmem_capacity_bytes()
    usable = min(vmem_cap * 3 // 4, 96 << 20)
    budget = usable if vmem_budget_bytes is None else min(int(vmem_budget_bytes), usable)

    tn = _pick_tile_n(N, C, HW, F1, F2, x_itemsize, budget)
    n_pad = _round_up(N, tn)
    if n_pad != N:
        x = jnp.pad(x, ((0, n_pad - N), (0, 0), (0, 0)))
    grid = (n_pad // tn,)

    x_row, out_row, inter_row, resident = _vmem_row_bytes(C, HW, F1, F2, x_itemsize)
    needed = resident + tn * (2 * (x_row + out_row) + inter_row) + (4 << 20)
    vmem_limit = int(min(max(needed, 8 << 20), usable))

    cost = pl.CostEstimate(
        flops=2 * n_pad * (HW * C + C * F1 + F1 * F2),
        transcendentals=n_pad,
        bytes_accessed=(n_pad * HW * C * x_itemsize
                        + (C * F1 + F1 * F2 + F1 + F2) * 4
                        + n_pad * F2 * 4),
    )

    out = pl.pallas_call(
        _moco_head_kernel,
        out_shape=jax.ShapeDtypeStruct((n_pad, F2), jnp.float32),
        grid_spec=pltpu.PrefetchScalarGridSpec(
            num_scalar_prefetch=0,
            grid=grid,
            in_specs=[
                pl.BlockSpec((tn, C, HW), lambda i: (i, 0, 0)),   # x tile, streams over N
                pl.BlockSpec((C, F1), lambda i: (0, 0)),          # w1/HW (VMEM-resident)
                pl.BlockSpec((1, F1), lambda i: (0, 0)),          # b1 (resident)
                pl.BlockSpec((F1, F2), lambda i: (0, 0)),         # w2 (resident)
                pl.BlockSpec((1, F2), lambda i: (0, 0)),          # b2 (resident)
            ],
            out_specs=pl.BlockSpec((tn, F2), lambda i: (i, 0)),   # lane-dense (F2>=128)
        ),
        compiler_params=pltpu.CompilerParams(
            dimension_semantics=(pltpu.PARALLEL,),
            vmem_limit_bytes=vmem_limit,
        ),
        cost_estimate=cost,
    )(x, w1_scaled, b1_2d, w2_f, b2_2d)

    return out[:N]


def _xavier_uniform(key, fan_in, fan_out):
    # matches mmcv xavier_init(distribution='uniform') used by init_weights()
    limit = jnp.sqrt(6.0 / (fan_in + fan_out))
    return jax.random.uniform(key, (fan_in, fan_out), jnp.float32, -limit, limit)


def _reference(x_nchw, w1, b1, w2, b2):
    # pure-JAX reference of the PyTorch forward (f32 math)
    pooled = jnp.mean(x_nchw.astype(jnp.float32), axis=(2, 3))   # avg_pool + flatten
    h = jnp.maximum(pooled @ w1 + b1, 0.0)
    y = h @ w2 + b2
    norm = jnp.maximum(jnp.linalg.norm(y, axis=1, keepdims=True), 1e-12)
    return y / norm


if __name__ == "__main__":
    # Small shapes consistent with the module defaults:
    #   in_channels=32, fc_mid_channels=128, fc_out_channels=128
    N, C, H, W = 2, 32, 16, 16
    F_MID, F_OUT = 128, 128

    key = jax.random.PRNGKey(0)
    kx, k1, k2 = jax.random.split(key, 3)

    x_f32 = jax.random.normal(kx, (N, C, H, W), jnp.float32)
    w1 = _xavier_uniform(k1, C, F_MID)            # stored (in, out) == torch weight.T
    b1 = jnp.zeros((F_MID,), jnp.float32)
    w2 = _xavier_uniform(k2, F_MID, F_OUT)
    b2 = jnp.zeros((F_OUT,), jnp.float32)

    # bf16-streamed path (what a mixed-precision backbone hands over; halves HBM traffic).
    x_bf16 = x_f32.astype(jnp.bfloat16)
    out_bf16 = jax.block_until_ready(moco_head_forward(x_bf16, w1, b1, w2, b2))
    ref_bf16 = _reference(x_bf16.astype(jnp.float32), w1, b1, w2, b2)
    assert out_bf16.shape == (N, F_OUT)
    assert jnp.allclose(out_bf16, ref_bf16, atol=2e-3, rtol=2e-3), "bf16 path mismatch"

    # f32-streamed path (no wrapper cast; exercises the f32 VMEM accounting branch).
    out_f32 = jax.block_until_ready(moco_head_forward(x_f32, w1, b1, w2, b2))
    ref_f32 = _reference(x_f32, w1, b1, w2, b2)
    assert jnp.allclose(out_f32, ref_f32, atol=1e-5, rtol=1e-5), "f32 path mismatch"

    # TODO(synk): num_convs>0 (ConvModule stack) and dropout_ratio!=0 branches are not
    # implemented; the module defaults (num_convs=0, dropout_ratio=0) make them identity.

    print("KERNEL_OK")
</pallas_src>

<mosaic_0001>
module attributes {stable_mosaic.version = 11 : i64} {
  func.func @_moco_head_kernel(%arg0: i32, %arg1: memref<8x32x256xbf16, #tpu.memory_space<vmem>>, %arg2: memref<32x128xf32, #tpu.memory_space<vmem>>, %arg3: memref<1x128xf32, #tpu.memory_space<vmem>>, %arg4: memref<128x128xf32, #tpu.memory_space<vmem>>, %arg5: memref<1x128xf32, #tpu.memory_space<vmem>>, %arg6: memref<8x128xf32, #tpu.memory_space<vmem>>) attributes {dimension_semantics = [#tpu.dimension_semantics<parallel>], iteration_bounds = array<i64: 1>, scalar_prefetch = 0 : i64, scratch_operands = 0 : i64, tpu.core_type = #tpu.core_type<tc>, window_params = [{transform_indices = @transform_0, window_bounds = array<i64: 8, 32, 256>}, {pipeline_mode = #tpu.pipeline_mode<synchronous>, transform_indices = @transform_1, window_bounds = array<i64: 32, 128>}, {pipeline_mode = #tpu.pipeline_mode<synchronous>, transform_indices = @transform_2, window_bounds = array<i64: 1, 128>}, {pipeline_mode = #tpu.pipeline_mode<synchronous>, transform_indices = @transform_3, window_bounds = array<i64: 128, 128>}, {pipeline_mode = #tpu.pipeline_mode<synchronous>, transform_indices = @transform_4, window_bounds = array<i64: 1, 128>}, {transform_indices = @transform_5, window_bounds = array<i64: 8, 128>}]} {
    %c0 = arith.constant 0 : index
    %c0_0 = arith.constant 0 : index
    %c0_1 = arith.constant 0 : index
    %0 = vector.load %arg1[%c0, %c0_0, %c0_1] : memref<8x32x256xbf16, #tpu.memory_space<vmem>>, vector<8x32x256xbf16>
    %1 = arith.extf %0 : vector<8x32x256xbf16> to vector<8x32x256xf32>
    %cst = arith.constant dense<0.000000e+00> : vector<8x32xf32>
    %2 = vector.multi_reduction <add>, %1, %cst [2] : vector<8x32x256xf32> to vector<8x32xf32>
    %c0_2 = arith.constant 0 : index
    %c0_3 = arith.constant 0 : index
    %3 = vector.load %arg2[%c0_2, %c0_3] : memref<32x128xf32, #tpu.memory_space<vmem>>, vector<32x128xf32>
    %cst_4 = arith.constant dense<0.000000e+00> : vector<8x128xf32>
    %4 = tpu.matmul %2, %3, %cst_4 {dimension_numbers = #tpu.dot_dimension_numbers<[1], [0], [0], [1], [0, 0, 1, 1], [], []>} : vector<8x32xf32>, vector<32x128xf32>, vector<8x128xf32> -> vector<8x128xf32>
    %c0_5 = arith.constant 0 : index
    %c0_6 = arith.constant 0 : index
    %5 = vector.load %arg3[%c0_5, %c0_6] : memref<1x128xf32, #tpu.memory_space<vmem>>, vector<1x128xf32>
    %6 = vector.broadcast %5 : vector<1x128xf32> to vector<8x128xf32>
    %7 = arith.addf %4, %6 : vector<8x128xf32>
    %cst_7 = arith.constant 0.000000e+00 : f32
    %8 = vector.broadcast %cst_7 : f32 to vector<8x128xf32>
    %9 = arith.maximumf %7, %8 : vector<8x128xf32>
    %c0_8 = arith.constant 0 : index
    %c0_9 = arith.constant 0 : index
    %10 = vector.load %arg4[%c0_8, %c0_9] : memref<128x128xf32, #tpu.memory_space<vmem>>, vector<128x128xf32>
    %cst_10 = arith.constant dense<0.000000e+00> : vector<8x128xf32>
    %11 = tpu.matmul %9, %10, %cst_10 {dimension_numbers = #tpu.dot_dimension_numbers<[1], [0], [0], [1], [0, 0, 1, 1], [], []>} : vector<8x128xf32>, vector<128x128xf32>, vector<8x128xf32> -> vector<8x128xf32>
    %c0_11 = arith.constant 0 : index
    %c0_12 = arith.constant 0 : index
    %12 = vector.load %arg5[%c0_11, %c0_12] : memref<1x128xf32, #tpu.memory_space<vmem>>, vector<1x128xf32>
    %13 = vector.broadcast %12 : vector<1x128xf32> to vector<8x128xf32>
    %14 = arith.addf %11, %13 : vector<8x128xf32>
    %15 = arith.mulf %14, %14 : vector<8x128xf32>
    %cst_13 = arith.constant dense<0.000000e+00> : vector<8xf32>
    %16 = vector.multi_reduction <add>, %15, %cst_13 [1] : vector<8x128xf32> to vector<8xf32>
    %17 = vector.shape_cast %16 : vector<8xf32> to vector<8x1xf32>
    %cst_14 = arith.constant 1.000000e-24 : f32
    %18 = vector.broadcast %cst_14 : f32 to vector<8x1xf32>
    %19 = arith.maximumf %17, %18 : vector<8x1xf32>
    %20 = math.rsqrt %19 : vector<8x1xf32>
    %21 = vector.broadcast %20 : vector<8x1xf32> to vector<8x128xf32>
    %22 = arith.mulf %14, %21 : vector<8x128xf32>
    %c0_15 = arith.constant 0 : index
    %c0_16 = arith.constant 0 : index
    %23 = vector.load %arg6[%c0_15, %c0_16] : memref<8x128xf32, #tpu.memory_space<vmem>>, vector<8x128xf32>
    tpu.vector_store %arg6[%c0_15, %c0_16], %22 {strides = array<i32>} : memref<8x128xf32, #tpu.memory_space<vmem>>, vector<8x128xf32>,
    return
  }
  func.func @transform_0(%arg0: i32) -> (i32, i32, i32) {
    %c0_i32 = arith.constant 0 : i32
    %c0_i32_0 = arith.constant 0 : i32
    %c0_i32_1 = arith.constant 0 : i32
    return %arg0, %c0_i32, %c0_i32_0 : i32, i32, i32
  }
  func.func @transform_1(%arg0: i32) -> (i32, i32) {
    %c0_i32 = arith.constant 0 : i32
    %c0_i32_0 = arith.constant 0 : i32
    %c0_i32_1 = arith.constant 0 : i32
    return %c0_i32, %c0_i32_0 : i32, i32
  }
  func.func @transform_2(%arg0: i32) -> (i32, i32) {
    %c0_i32 = arith.constant 0 : i32
    %c0_i32_0 = arith.constant 0 : i32
    %c0_i32_1 = arith.constant 0 : i32
    return %c0_i32, %c0_i32_0 : i32, i32
  }
  func.func @transform_3(%arg0: i32) -> (i32, i32) {
    %c0_i32 = arith.constant 0 : i32
    %c0_i32_0 = arith.constant 0 : i32
    %c0_i32_1 = arith.constant 0 : i32
    return %c0_i32, %c0_i32_0 : i32, i32
  }
  func.func @transform_4(%arg0: i32) -> (i32, i32) {
    %c0_i32 = arith.constant 0 : i32
    %c0_i32_0 = arith.constant 0 : i32
    %c0_i32_1 = arith.constant 0 : i32
    return %c0_i32, %c0_i32_0 : i32, i32
  }
  func.func @transform_5(%arg0: i32) -> (i32, i32) {
    %c0_i32 = arith.constant 0 : i32
    %c0_i32_0 = arith.constant 0 : i32
    return %arg0, %c0_i32 : i32, i32
  }
}

</mosaic_0001>

<llo_original>
// kernel: tpu_custom_call.1
$region0: #{tpu_custom_call.1}
  #allocation0 [shape = 'u32[]', space=smem, size = 0x4, offset = 0x4, fixed_abs, tag = 'smem constant byte address 0x4 - core index']
  #allocation1 [shape = 'u32[144,128]{1,0:T(1,128)}', space=vmem, size = 0x12000, scoped, tag = 'internal scratch']
  %s0 = inlined_call_operand.hbm [shape: bf16[8,32,256], index: 0, kind: input, shape index: {}]
  %s1 = inlined_call_operand.hbm [shape: f32[32,128], index: 1, kind: input, shape index: {}]
  %s2 = inlined_call_operand.vmem [shape: f32[1,128], index: 2, kind: input, shape index: {}]
  %s3 = inlined_call_operand.hbm [shape: f32[128,128], index: 3, kind: input, shape index: {}]
  %s4 = inlined_call_operand.vmem [shape: f32[1,128], index: 4, kind: input, shape index: {}]
  %s5 = inlined_call_operand.hbm [shape: f32[8,128], index: 5, kind: output, shape index: {}]
  %s6 = sld [smem:[#allocation0]]
  $region42: #{tpu_custom_call.1} parent=0
    _
  %s8 = ssub.s32 1, %s6
  %s9 = scalar_select 0, %s8, %s6
  $region1: #{tpu_custom_call.1} parent=0
    #allocation2 [shape = 'u8[131072]{0}', space=vmem, size = 0x20000, scoped, tag = 'input window, operand 0, single buffered']
    #allocation3 [shape = 's32[1]{0}', space=sflag, size = 0x4, scoped, tag = 'scoped memory for tpu_custom_call.1']
    #allocation4 [shape = 's32[1]{0}', space=sflag, size = 0x4, scoped, tag = 'scoped memory for tpu_custom_call.1']
    #allocation5 [shape = 'u8[16384]{0}', space=vmem, size = 0x4000, scoped, tag = 'input window, operand 1, single buffered']
    #allocation6 [shape = 's32[1]{0}', space=sflag, size = 0x4, scoped, tag = 'scoped memory for tpu_custom_call.1']
    #allocation7 [shape = 'u8[65536]{0}', space=vmem, size = 0x10000, scoped, tag = 'input window, operand 3, single buffered']
    #allocation8 [shape = 'u8[4096]{0}', space=vmem, size = 0x1000, scoped, tag = 'output window, operand 0, single buffered']
    %10 = vsyncpa [#allocation3], 0
    %11 = vsyncpa [#allocation6], 0
    %12 = vsyncpa [#allocation4], 0
    // Predicated region
    $region2: #{tpu_custom_call.1} parent=1 // pred_check
      _
    $region3: #{tpu_custom_call.1} parent=1 // pred_check_branch
      %14 = sbr.rel (0) target = $region5
    $region4: #{tpu_custom_call.1} parent=1 // pred_region
      %s16 = ssub.s32 4096, 4096
      %17 = vsyncadd [#allocation3], %s16
      %s18 = sshll.u32 [#allocation2], 4
      %s19 = int_to_ptr.vmem [resolvable:$true] %s18
      %24 = dma.hbm_to_vmem [thread:$0]  %s0, 4096, %s19, [#allocation3], 128, 128, 8
    $region5: #{tpu_custom_call.1} parent=1 // pred_fallthru
      _
    // Predicated region
    $region6: #{tpu_custom_call.1} parent=1 // pred_check
      _
    $region7: #{tpu_custom_call.1} parent=1 // pred_check_branch
      %26 = sbr.rel (0) target = $region9
    $region8: #{tpu_custom_call.1} parent=1 // pred_region
      %s28 = ssub.s32 512, 512
      %29 = vsyncadd [#allocation6], %s28
      %s30 = sshll.u32 [#allocation5], 4
      %s31 = int_to_ptr.vmem [resolvable:$true] %s30
      %36 = dma.hbm_to_vmem [thread:$0]  %s1, 512, %s31, [#allocation6], 128, 128, 8
    $region9: #{tpu_custom_call.1} parent=1 // pred_fallthru
      _
    // Predicated region
    $region10: #{tpu_custom_call.1} parent=1 // pred_check
      _
    $region11: #{tpu_custom_call.1} parent=1 // pred_check_branch
      %38 = sbr.rel (0) target = $region13
    $region12: #{tpu_custom_call.1} parent=1 // pred_region
      _
    $region13: #{tpu_custom_call.1} parent=1 // pred_fallthru
      _
    // Predicated region
    $region14: #{tpu_custom_call.1} parent=1 // pred_check
      _
    $region15: #{tpu_custom_call.1} parent=1 // pred_check_branch
      %40 = sbr.rel (0) target = $region17
    $region16: #{tpu_custom_call.1} parent=1 // pred_region
      %s42 = ssub.s32 2048, 2048
      %43 = vsyncadd [#allocation6], %s42
      %s44 = sshll.u32 [#allocation7], 4
      %s45 = int_to_ptr.vmem [resolvable:$true] %s44
      %50 = dma.hbm_to_vmem [thread:$0]  %s3, 2048, %s45, [#allocation6], 128, 128, 8
    $region17: #{tpu_custom_call.1} parent=1 // pred_fallthru
      _
    // Predicated region
    $region18: #{tpu_custom_call.1} parent=1 // pred_check
      _
    $region19: #{tpu_custom_call.1} parent=1 // pred_check_branch
      %52 = sbr.rel (0) target = $region21
    $region20: #{tpu_custom_call.1} parent=1 // pred_region
      _
    $region21: #{tpu_custom_call.1} parent=1 // pred_fallthru
      _
    // Predicated region
    $region22: #{tpu_custom_call.1} parent=1 // pred_check
      _
    $region23: #{tpu_custom_call.1} parent=1 // pred_check_branch
      %54 = sbr.rel (0) target = $region25
    $region24: #{tpu_custom_call.1} parent=1 // pred_region
      %55 = dma.done [#allocation3], 4096
    $region25: #{tpu_custom_call.1} parent=1 // pred_fallthru
      _
    // Predicated region
    $region26: #{tpu_custom_call.1} parent=1 // pred_check
      _
    $region27: #{tpu_custom_call.1} parent=1 // pred_check_branch
      %57 = sbr.rel (0) target = $region29
    $region28: #{tpu_custom_call.1} parent=1 // pred_region
      %58 = dma.done [#allocation6], 512
    $region29: #{tpu_custom_call.1} parent=1 // pred_fallthru
      _
    // Predicated region
    $region30: #{tpu_custom_call.1} parent=1 // pred_check
      _
    $region31: #{tpu_custom_call.1} parent=1 // pred_check_branch
      %60 = sbr.rel (0) target = $region33
    $region32: #{tpu_custom_call.1} parent=1 // pred_region
      %61 = dma.done [#allocation6], 2048
    $region33: #{tpu_custom_call.1} parent=1 // pred_fallthru
      _
    %v62 = vld [vmem:[#allocation2] sm:$0xff]
    %v63 = vld [vmem:[#allocation2 + $0x8] sm:$0xff]
    %v64 = vld [vmem:[#allocation2 + $0x10] sm:$0xff]
    %v65 = vld [vmem:[#allocation2 + $0x18] sm:$0xff]
    %v66 = vld [vmem:[#allocation2 + $0x20] sm:$0xff]
    %v67 = vld [vmem:[#allocation2 + $0x28] sm:$0xff]
    %v68 = vld [vmem:[#allocation2 + $0x30] sm:$0xff]
    %v69 = vld [vmem:[#allocation2 + $0x38] sm:$0xff]
    %v70 = vld [vmem:[#allocation2 + $0x40] sm:$0xff]
    %v71 = vld [vmem:[#allocation2 + $0x48] sm:$0xff]
    %v72 = vld [vmem:[#allocation2 + $0x50] sm:$0xff]
    %v73 = vld [vmem:[#allocation2 + $0x58] sm:$0xff]
    %v74 = vld [vmem:[#allocation2 + $0x60] sm:$0xff]
    %v75 = vld [vmem:[#allocation2 + $0x68] sm:$0xff]
    %v76 = vld [vmem:[#allocation2 + $0x70] sm:$0xff]
    %v77 = vld [vmem:[#allocation2 + $0x78] sm:$0xff]
    %v78 = vld [vmem:[#allocation2 + $0x80] sm:$0xff]
    %v79 = vld [vmem:[#allocation2 + $0x88] sm:$0xff]
    %v80 = vld [vmem:[#allocation2 + $0x90] sm:$0xff]
    %v81 = vld [vmem:[#allocation2 + $0x98] sm:$0xff]
    %v82 = vld [vmem:[#allocation2 + $0xa0] sm:$0xff]
    %v83 = vld [vmem:[#allocation2 + $0xa8] sm:$0xff]
    %v84 = vld [vmem:[#allocation2 + $0xb0] sm:$0xff]
    %v85 = vld [vmem:[#allocation2 + $0xb8] sm:$0xff]
    %v86 = vld [vmem:[#allocation2 + $0xc0] sm:$0xff]
    %v87 = vld [vmem:[#allocation2 + $0xc8] sm:$0xff]
    %v88 = vld [vmem:[#allocation2 + $0xd0] sm:$0xff]
    %v89 = vld [vmem:[#allocation2 + $0xd8] sm:$0xff]
    %v90 = vld [vmem:[#allocation2 + $0xe0] sm:$0xff]
    %v91 = vld [vmem:[#allocation2 + $0xe8] sm:$0xff]
    %v92 = vld [vmem:[#allocation2 + $0xf0] sm:$0xff]
    %v93 = vld [vmem:[#allocation2 + $0xf8] sm:$0xff]
    %v94 = vunpack.c.l.bf16 %v62
    %v95 = vunpack.c.h.bf16 %v62
    %v96 = vunpack.c.l.bf16 %v63
    %v97 = vunpack.c.h.bf16 %v63
    %v98 = vunpack.c.l.bf16 %v64
    %v99 = vunpack.c.h.bf16 %v64
    %v100 = vunpack.c.l.bf16 %v65
    %v101 = vunpack.c.h.bf16 %v65
    %v102 = vunpack.c.l.bf16 %v66
    %v103 = vunpack.c.h.bf16 %v66
    %v104 = vunpack.c.l.bf16 %v67
    %v105 = vunpack.c.h.bf16 %v67
    %v106 = vunpack.c.l.bf16 %v68
    %v107 = vunpack.c.h.bf16 %v68
    %v108 = vunpack.c.l.bf16 %v69
    %v109 = vunpack.c.h.bf16 %v69
    %v110 = vunpack.c.l.bf16 %v70
    %v111 = vunpack.c.h.bf16 %v70
    %v112 = vunpack.c.l.bf16 %v71
    %v113 = vunpack.c.h.bf16 %v71
    %v114 = vunpack.c.l.bf16 %v72
    %v115 = vunpack.c.h.bf16 %v72
    %v116 = vunpack.c.l.bf16 %v73
    %v117 = vunpack.c.h.bf16 %v73
    %v118 = vunpack.c.l.bf16 %v74
    %v119 = vunpack.c.h.bf16 %v74
    %v120 = vunpack.c.l.bf16 %v75
    %v121 = vunpack.c.h.bf16 %v75
    %v122 = vunpack.c.l.bf16 %v76
    %v123 = vunpack.c.h.bf16 %v76
    %v124 = vunpack.c.l.bf16 %v77
    %v125 = vunpack.c.h.bf16 %v77
    %v126 = vunpack.c.l.bf16 %v78
    %v127 = vunpack.c.h.bf16 %v78
    %v128 = vunpack.c.l.bf16 %v79
    %v129 = vunpack.c.h.bf16 %v79
    %v130 = vunpack.c.l.bf16 %v80
    %v131 = vunpack.c.h.bf16 %v80
    %v132 = vunpack.c.l.bf16 %v81
    %v133 = vunpack.c.h.bf16 %v81
    %v134 = vunpack.c.l.bf16 %v82
    %v135 = vunpack.c.h.bf16 %v82
    %v136 = vunpack.c.l.bf16 %v83
    %v137 = vunpack.c.h.bf16 %v83
    %v138 = vunpack.c.l.bf16 %v84
    %v139 = vunpack.c.h.bf16 %v84
    %v140 = vunpack.c.l.bf16 %v85
    %v141 = vunpack.c.h.bf16 %v85
    %v142 = vunpack.c.l.bf16 %v86
    %v143 = vunpack.c.h.bf16 %v86
    %v144 = vunpack.c.l.bf16 %v87
    %v145 = vunpack.c.h.bf16 %v87
    %v146 = vunpack.c.l.bf16 %v88
    %v147 = vunpack.c.h.bf16 %v88
    %v148 = vunpack.c.l.bf16 %v89
    %v149 = vunpack.c.h.bf16 %v89
    %v150 = vunpack.c.l.bf16 %v90
    %v151 = vunpack.c.h.bf16 %v90
    %v152 = vunpack.c.l.bf16 %v91
    %v153 = vunpack.c.h.bf16 %v91
    %v154 = vunpack.c.l.bf16 %v92
    %v155 = vunpack.c.h.bf16 %v92
    %v156 = vunpack.c.l.bf16 %v93
    %v157 = vunpack.c.h.bf16 %v93
    %v158 = vadd.f32 %v94, %v95
    %159 = vadd.xlane.f32.xlu0 %v158
    %v160 = vpop.xlane.xlu0 %159
    %v161 = vadd.f32 %v96, %v97
    %162 = vadd.xlane.f32.xlu0 %v161
    %v163 = vpop.xlane.xlu0 %162
    %v164 = vadd.f32 %v98, %v99
    %165 = vadd.xlane.f32.xlu0 %v164
    %v166 = vpop.xlane.xlu0 %165
    %v167 = vadd.f32 %v100, %v101
    %168 = vadd.xlane.f32.xlu0 %v167
    %v169 = vpop.xlane.xlu0 %168
    %v170 = vadd.f32 %v102, %v103
    %171 = vadd.xlane.f32.xlu0 %v170
    %v172 = vpop.xlane.xlu0 %171
    %v173 = vadd.f32 %v104, %v105
    %174 = vadd.xlane.f32.xlu0 %v173
    %v175 = vpop.xlane.xlu0 %174
    %v176 = vadd.f32 %v106, %v107
    %177 = vadd.xlane.f32.xlu0 %v176
    %v178 = vpop.xlane.xlu0 %177
    %v179 = vadd.f32 %v108, %v109
    %180 = vadd.xlane.f32.xlu0 %v179
    %v181 = vpop.xlane.xlu0 %180
    %v182 = vadd.f32 %v110, %v111
    %183 = vadd.xlane.f32.xlu0 %v182
    %v184 = vpop.xlane.xlu0 %183
    %v185 = vadd.f32 %v112, %v113
    %186 = vadd.xlane.f32.xlu0 %v185
    %v187 = vpop.xlane.xlu0 %186
    %v188 = vadd.f32 %v114, %v115
    %189 = vadd.xlane.f32.xlu0 %v188
    %v190 = vpop.xlane.xlu0 %189
    %v191 = vadd.f32 %v116, %v117
    %192 = vadd.xlane.f32.xlu0 %v191
    %v193 = vpop.xlane.xlu0 %192
    %v194 = vadd.f32 %v118, %v119
    %195 = vadd.xlane.f32.xlu0 %v194
    %v196 = vpop.xlane.xlu0 %195
    %v197 = vadd.f32 %v120, %v121
    %198 = vadd.xlane.f32.xlu0 %v197
    %v199 = vpop.xlane.xlu0 %198
    %v200 = vadd.f32 %v122, %v123
    %201 = vadd.xlane.f32.xlu0 %v200
    %v202 = vpop.xlane.xlu0 %201
    %v203 = vadd.f32 %v124, %v125
    %204 = vadd.xlane.f32.xlu0 %v203
    %v205 = vpop.xlane.xlu0 %204
    %v206 = vadd.f32 %v126, %v127
    %207 = vadd.xlane.f32.xlu0 %v206
    %v208 = vpop.xlane.xlu0 %207
    %v209 = vadd.f32 %v128, %v129
    %210 = vadd.xlane.f32.xlu0 %v209
    %v211 = vpop.xlane.xlu0 %210
    %v212 = vadd.f32 %v130, %v131
    %213 = vadd.xlane.f32.xlu0 %v212
    %v214 = vpop.xlane.xlu0 %213
    %v215 = vadd.f32 %v132, %v133
    %216 = vadd.xlane.f32.xlu0 %v215
    %v217 = vpop.xlane.xlu0 %216
    %v218 = vadd.f32 %v134, %v135
    %219 = vadd.xlane.f32.xlu0 %v218
    %v220 = vpop.xlane.xlu0 %219
    %v221 = vadd.f32 %v136, %v137
    %222 = vadd.xlane.f32.xlu0 %v221
    %v223 = vpop.xlane.xlu0 %222
    %v224 = vadd.f32 %v138, %v139
    %225 = vadd.xlane.f32.xlu0 %v224
    %v226 = vpop.xlane.xlu0 %225
    %v227 = vadd.f32 %v140, %v141
    %228 = vadd.xlane.f32.xlu0 %v227
    %v229 = vpop.xlane.xlu0 %228
    %v230 = vadd.f32 %v142, %v143
    %231 = vadd.xlane.f32.xlu0 %v230
    %v232 = vpop.xlane.xlu0 %231
    %v233 = vadd.f32 %v144, %v145
    %234 = vadd.xlane.f32.xlu0 %v233
    %v235 = vpop.xlane.xlu0 %234
    %v236 = vadd.f32 %v146, %v147
    %237 = vadd.xlane.f32.xlu0 %v236
    %v238 = vpop.xlane.xlu0 %237
    %v239 = vadd.f32 %v148, %v149
    %240 = vadd.xlane.f32.xlu0 %v239
    %v241 = vpop.xlane.xlu0 %240
    %v242 = vadd.f32 %v150, %v151
    %243 = vadd.xlane.f32.xlu0 %v242
    %v244 = vpop.xlane.xlu0 %243
    %v245 = vadd.f32 %v152, %v153
    %246 = vadd.xlane.f32.xlu0 %v245
    %v247 = vpop.xlane.xlu0 %246
    %v248 = vadd.f32 %v154, %v155
    %249 = vadd.xlane.f32.xlu0 %v248
    %v250 = vpop.xlane.xlu0 %249
    %v251 = vadd.f32 %v156, %v157
    %252 = vadd.xlane.f32.xlu0 %v251
    %v253 = vpop.xlane.xlu0 %252
    %v254 = vld [vmem:[#allocation5] sm:$0xff]
    %v255 = vld [vmem:[#allocation5 + $0x8] sm:$0xff]
    %v256 = vld [vmem:[#allocation5 + $0x10] sm:$0xff]
    %v257 = vld [vmem:[#allocation5 + $0x18] sm:$0xff]
    %v258 = vld [vmem:[%s2] sm:$0x1]
    %v260 = vlaneseq
    %v261 = vshrl.u32 %v260, 7
    %v262 = vsub.s32 0, %v261
    %v263 = vrot.slane %v258, %v262
    %v297 = vlaneseq
    %v298 = vand.u32 %v297, 127
    %v299 = vlaneseq
    %v300 = vshrl.u32 %v299, 7
    %v301 = vsub.s32 %v298, %v300
    %v302 = vrot.slane %v160, %v301
    %v303 = vadd.s32 %v298, 4294967288
    %v304 = vlaneseq
    %v305 = vshrl.u32 %v304, 7
    %v306 = vsub.s32 %v303, %v305
    %v307 = vrot.slane %v163, %v306
    %vm308 = vcmask 130112
    %v309 = vsel %vm308, %v307, %v302
    %v310 = vadd.s32 %v298, 4294967280
    %v311 = vlaneseq
    %v312 = vshrl.u32 %v311, 7
    %v313 = vsub.s32 %v310, %v312
    %v314 = vrot.slane %v166, %v313
    %vm315 = vcmask 195712
    %v316 = vsel %vm315, %v314, %v309
    %v317 = vadd.s32 %v298, 4294967272
    %v318 = vlaneseq
    %v319 = vshrl.u32 %v318, 7
    %v320 = vsub.s32 %v317, %v319
    %v321 = vrot.slane %v169, %v320
    %vm322 = vcmask 261312
    %v323 = vsel %vm322, %v321, %v316
    %v324 = vlaneseq
    %v325 = vshrl.u32 %v324, 7
    %v326 = vsub.s32 %v298, %v325
    %v327 = vrot.slane %v172, %v326
    %v328 = vlaneseq
    %v329 = vshrl.u32 %v328, 7
    %v330 = vsub.s32 %v303, %v329
    %v331 = vrot.slane %v175, %v330
    %v332 = vsel %vm308, %v331, %v327
    %v333 = vlaneseq
    %v334 = vshrl.u32 %v333, 7
    %v335 = vsub.s32 %v310, %v334
    %v336 = vrot.slane %v178, %v335
    %v337 = vsel %vm315, %v336, %v332
    %v338 = vlaneseq
    %v339 = vshrl.u32 %v338, 7
    %v340 = vsub.s32 %v317, %v339
    %v341 = vrot.slane %v181, %v340
    %v342 = vsel %vm322, %v341, %v337
    %v343 = vlaneseq
    %v344 = vshrl.u32 %v343, 7
    %v345 = vsub.s32 %v298, %v344
    %v346 = vrot.slane %v184, %v345
    %v347 = vlaneseq
    %v348 = vshrl.u32 %v347, 7
    %v349 = vsub.s32 %v303, %v348
    %v350 = vrot.slane %v187, %v349
    %v351 = vsel %vm308, %v350, %v346
    %v352 = vlaneseq
    %v353 = vshrl.u32 %v352, 7
    %v354 = vsub.s32 %v310, %v353
    %v355 = vrot.slane %v190, %v354
    %v356 = vsel %vm315, %v355, %v351
    %v357 = vlaneseq
    %v358 = vshrl.u32 %v357, 7
    %v359 = vsub.s32 %v317, %v358
    %v360 = vrot.slane %v193, %v359
    %v361 = vsel %vm322, %v360, %v356
    %v362 = vlaneseq
    %v363 = vshrl.u32 %v362, 7
    %v364 = vsub.s32 %v298, %v363
    %v365 = vrot.slane %v196, %v364
    %v366 = vlaneseq
    %v367 = vshrl.u32 %v366, 7
    %v368 = vsub.s32 %v303, %v367
    %v369 = vrot.slane %v199, %v368
    %v370 = vsel %vm308, %v369, %v365
    %v371 = vlaneseq
    %v372 = vshrl.u32 %v371, 7
    %v373 = vsub.s32 %v310, %v372
    %v374 = vrot.slane %v202, %v373
    %v375 = vsel %vm315, %v374, %v370
    %v376 = vlaneseq
    %v377 = vshrl.u32 %v376, 7
    %v378 = vsub.s32 %v317, %v377
    %v379 = vrot.slane %v205, %v378
    %v380 = vsel %vm322, %v379, %v375
    %v381 = vlaneseq
    %v382 = vshrl.u32 %v381, 7
    %v383 = vsub.s32 %v298, %v382
    %v384 = vrot.slane %v208, %v383
    %v385 = vlaneseq
    %v386 = vshrl.u32 %v385, 7
    %v387 = vsub.s32 %v303, %v386
    %v388 = vrot.slane %v211, %v387
    %v389 = vsel %vm308, %v388, %v384
    %v390 = vlaneseq
    %v391 = vshrl.u32 %v390, 7
    %v392 = vsub.s32 %v310, %v391
    %v393 = vrot.slane %v214, %v392
    %v394 = vsel %vm315, %v393, %v389
    %v395 = vlaneseq
    %v396 = vshrl.u32 %v395, 7
    %v397 = vsub.s32 %v317, %v396
    %v398 = vrot.slane %v217, %v397
    %v399 = vsel %vm322, %v398, %v394
    %v400 = vlaneseq
    %v401 = vshrl.u32 %v400, 7
    %v402 = vsub.s32 %v298, %v401
    %v403 = vrot.slane %v220, %v402
    %v404 = vlaneseq
    %v405 = vshrl.u32 %v404, 7
    %v406 = vsub.s32 %v303, %v405
    %v407 = vrot.slane %v223, %v406
    %v408 = vsel %vm308, %v407, %v403
    %v409 = vlaneseq
    %v410 = vshrl.u32 %v409, 7
    %v411 = vsub.s32 %v310, %v410
    %v412 = vrot.slane %v226, %v411
    %v413 = vsel %vm315, %v412, %v408
    %v414 = vlaneseq
    %v415 = vshrl.u32 %v414, 7
    %v416 = vsub.s32 %v317, %v415
    %v417 = vrot.slane %v229, %v416
    %v418 = vsel %vm322, %v417, %v413
    %v419 = vlaneseq
    %v420 = vshrl.u32 %v419, 7
    %v421 = vsub.s32 %v298, %v420
    %v422 = vrot.slane %v232, %v421
    %v423 = vlaneseq
    %v424 = vshrl.u32 %v423, 7
    %v425 = vsub.s32 %v303, %v424
    %v426 = vrot.slane %v235, %v425
    %v427 = vsel %vm308, %v426, %v422
    %v428 = vlaneseq
    %v429 = vshrl.u32 %v428, 7
    %v430 = vsub.s32 %v310, %v429
    %v431 = vrot.slane %v238, %v430
    %v432 = vsel %vm315, %v431, %v427
    %v433 = vlaneseq
    %v434 = vshrl.u32 %v433, 7
    %v435 = vsub.s32 %v317, %v434
    %v436 = vrot.slane %v241, %v435
    %v437 = vsel %vm322, %v436, %v432
    %v438 = vlaneseq
    %v439 = vshrl.u32 %v438, 7
    %v440 = vsub.s32 %v298, %v439
    %v441 = vrot.slane %v244, %v440
    %v442 = vlaneseq
    %v443 = vshrl.u32 %v442, 7
    %v444 = vsub.s32 %v303, %v443
    %v445 = vrot.slane %v247, %v444
    %v446 = vsel %vm308, %v445, %v441
    %v447 = vlaneseq
    %v448 = vshrl.u32 %v447, 7
    %v449 = vsub.s32 %v310, %v448
    %v450 = vrot.slane %v250, %v449
    %v451 = vsel %vm315, %v450, %v446
    %v452 = vlaneseq
    %v453 = vshrl.u32 %v452, 7
    %v454 = vsub.s32 %v317, %v453
    %v455 = vrot.slane %v253, %v454
    %v456 = vsel %vm322, %v455, %v451
    %vm457 = vcmask 1041409
    %v458 = vsel %vm457, %v342, %v323
    %vm459 = vcmask 1042434
    %v460 = vsel %vm459, %v361, %v458
    %vm461 = vcmask 1043459
    %v462 = vsel %vm461, %v380, %v460
    %vm463 = vcmask 1044484
    %v464 = vsel %vm463, %v399, %v462
    %vm465 = vcmask 1045509
    %v466 = vsel %vm465, %v418, %v464
    %vm467 = vcmask 1046534
    %v468 = vsel %vm467, %v437, %v466
    %vm469 = vcmask 1047559
    %v470 = vsel %vm469, %v456, %v468
    %vm471 = vcmask 261120
    %v472 = vsel %vm471, %v470, 0
    %474 = vmatprep.subr.mxu0 0.0
    %475 = vmatpush1.msra.mxu0 %v254
    %476 = vmatprep.subr.mxu0 0.0
    %477 = vmatpush1.msra.mxu0 %v255
    %478 = vmatprep.subr.mxu0 0.0
    %479 = vmatpush1.msra.mxu0 %v256
    %480 = vmatprep.subr.mxu0 0.0
    %481 = vmatpush1.msra.mxu0 %v257
    %482 = vmatprep.subr.mxu0 0.0
    %483 = vmatpush1.msra.mxu0 0.0
    %484 = vmatprep.subr.mxu0 0.0
    %485 = vmatpush1.msra.mxu0 0.0
    %486 = vmatprep.subr.mxu0 0.0
    %487 = vmatpush1.msra.mxu0 0.0
    %488 = vmatprep.subr.mxu0 0.0
    %489 = vmatpush1.msra.mxu0 0.0
    %490 = vmatprep.subr.mxu0 0.0
    %491 = vmatpush1.msra.mxu0 0.0
    %492 = vmatprep.subr.mxu0 0.0
    %493 = vmatpush1.msra.mxu0 0.0
    %494 = vmatprep.subr.mxu0 0.0
    %495 = vmatpush1.msra.mxu0 0.0
    %496 = vmatprep.subr.mxu0 0.0
    %497 = vmatpush1.msra.mxu0 0.0
    %498 = vmatprep.subr.mxu0 0.0
    %499 = vmatpush1.msra.mxu0 0.0
    %500 = vmatprep.subr.mxu0 0.0
    %501 = vmatpush1.msra.mxu0 0.0
    %502 = vmatprep.subr.mxu0 0.0
    %503 = vmatpush1.msra.mxu0 0.0
    %504 = vmatprep.subr.mxu0 0.0
    %505 = vmatpush1.msra.mxu0 0.0
    %506 = vmatprep.subr.mxu0 0.0
    %507 = vmatpush1.msra.mxu0 0.0
    %508 = vmatprep.subr.mxu0 0.0
    %509 = vmatpush1.msra.mxu0 0.0
    %510 = vmatprep.subr.mxu0 0.0
    %511 = vmatpush1.msra.mxu0 0.0
    %512 = vmatprep.subr.mxu0 0.0
    %513 = vmatpush1.msra.mxu0 0.0
    %514 = vmatprep.subr.mxu0 0.0
    %515 = vmatpush1.msra.mxu0 0.0
    %516 = vmatprep.subr.mxu0 0.0
    %517 = vmatpush1.msra.mxu0 0.0
    %518 = vmatprep.subr.mxu0 0.0
    %519 = vmatpush1.msra.mxu0 0.0
    %520 = vmatprep.subr.mxu0 0.0
    %521 = vmatpush1.msra.mxu0 0.0
    %522 = vmatprep.subr.mxu0 0.0
    %523 = vmatpush1.msra.mxu0 0.0
    %524 = vmatprep.subr.mxu0 0.0
    %525 = vmatpush1.msra.mxu0 0.0
    %526 = vmatprep.subr.mxu0 0.0
    %527 = vmatpush1.msra.mxu0 0.0
    %528 = vmatprep.subr.mxu0 0.0
    %529 = vmatpush1.msra.mxu0 0.0
    %530 = vmatprep.subr.mxu0 0.0
    %531 = vmatpush1.msra.mxu0 0.0
    %532 = vmatprep.subr.mxu0 0.0
    %533 = vmatpush1.msra.mxu0 0.0
    %534 = vmatprep.subr.mxu0 0.0
    %535 = vmatpush1.msra.mxu0 0.0
    %536 = vmatprep.subr.mxu0 0.0
    %537 = vmatpush1.msra.mxu0 0.0
    %538 = vmatprep.mubr.f32.mxu0 0.0
    %539 = vmatmul.mubr.f32.gmra.mrb[0].mxu0 %v472
    %v540 = vpop.f32.mrb[0].mxu0
    %v541 = vadd.f32 %v263, %v540
    %v542 = vpop.f32.mrb[0].mxu0
    %543 = vdwg.mxu0
    %v544 = vmax.f32 %v541, 0.0
    %v545 = vld [vmem:[#allocation7] sm:$0xff]
    %v546 = vld [vmem:[#allocation7 + $0x8] sm:$0xff]
    %v547 = vld [vmem:[#allocation7 + $0x10] sm:$0xff]
    %v548 = vld [vmem:[#allocation7 + $0x18] sm:$0xff]
    %v549 = vld [vmem:[#allocation7 + $0x20] sm:$0xff]
    %v550 = vld [vmem:[#allocation7 + $0x28] sm:$0xff]
    %v551 = vld [vmem:[#allocation7 + $0x30] sm:$0xff]
    %v552 = vld [vmem:[#allocation7 + $0x38] sm:$0xff]
    %v553 = vld [vmem:[#allocation7 + $0x40] sm:$0xff]
    %v554 = vld [vmem:[#allocation7 + $0x48] sm:$0xff]
    %v555 = vld [vmem:[#allocation7 + $0x50] sm:$0xff]
    %v556 = vld [vmem:[#allocation7 + $0x58] sm:$0xff]
    %v557 = vld [vmem:[#allocation7 + $0x60] sm:$0xff]
    %v558 = vld [vmem:[#allocation7 + $0x68] sm:$0xff]
    %v559 = vld [vmem:[#allocation7 + $0x70] sm:$0xff]
    %v560 = vld [vmem:[#allocation7 + $0x78] sm:$0xff]
    %v561 = vld [vmem:[%s4] sm:$0x1]
    %v563 = vlaneseq
    %v564 = vshrl.u32 %v563, 7
    %v565 = vsub.s32 0, %v564
    %v566 = vrot.slane %v561, %v565
    %568 = vmatprep.subr.mxu0 0.0
    %569 = vmatpush1.msra.mxu0 %v545
    %570 = vmatprep.subr.mxu0 0.0
    %571 = vmatpush1.msra.mxu0 %v546
    %572 = vmatprep.subr.mxu0 0.0
    %573 = vmatpush1.msra.mxu0 %v547
    %574 = vmatprep.subr.mxu0 0.0
    %575 = vmatpush1.msra.mxu0 %v548
    %576 = vmatprep.subr.mxu0 0.0
    %577 = vmatpush1.msra.mxu0 %v549
    %578 = vmatprep.subr.mxu0 0.0
    %579 = vmatpush1.msra.mxu0 %v550
    %580 = vmatprep.subr.mxu0 0.0
    %581 = vmatpush1.msra.mxu0 %v551
    %582 = vmatprep.subr.mxu0 0.0
    %583 = vmatpush1.msra.mxu0 %v552
    %584 = vmatprep.subr.mxu0 0.0
    %585 = vmatpush1.msra.mxu0 %v553
    %586 = vmatprep.subr.mxu0 0.0
    %587 = vmatpush1.msra.mxu0 %v554
    %588 = vmatprep.subr.mxu0 0.0
    %589 = vmatpush1.msra.mxu0 %v555
    %590 = vmatprep.subr.mxu0 0.0
    %591 = vmatpush1.msra.mxu0 %v556
    %592 = vmatprep.subr.mxu0 0.0
    %593 = vmatpush1.msra.mxu0 %v557
    %594 = vmatprep.subr.mxu0 0.0
    %595 = vmatpush1.msra.mxu0 %v558
    %596 = vmatprep.subr.mxu0 0.0
    %597 = vmatpush1.msra.mxu0 %v559
    %598 = vmatprep.subr.mxu0 0.0
    %599 = vmatpush1.msra.mxu0 %v560
    %600 = vmatprep.subr.mxu0 0.0
    %601 = vmatpush1.msra.mxu0 0.0
    %602 = vmatprep.subr.mxu0 0.0
    %603 = vmatpush1.msra.mxu0 0.0
    %604 = vmatprep.subr.mxu0 0.0
    %605 = vmatpush1.msra.mxu0 0.0
    %606 = vmatprep.subr.mxu0 0.0
    %607 = vmatpush1.msra.mxu0 0.0
    %608 = vmatprep.subr.mxu0 0.0
    %609 = vmatpush1.msra.mxu0 0.0
    %610 = vmatprep.subr.mxu0 0.0
    %611 = vmatpush1.msra.mxu0 0.0
    %612 = vmatprep.subr.mxu0 0.0
    %613 = vmatpush1.msra.mxu0 0.0
    %614 = vmatprep.subr.mxu0 0.0
    %615 = vmatpush1.msra.mxu0 0.0
    %616 = vmatprep.subr.mxu0 0.0
    %617 = vmatpush1.msra.mxu0 0.0
    %618 = vmatprep.subr.mxu0 0.0
    %619 = vmatpush1.msra.mxu0 0.0
    %620 = vmatprep.subr.mxu0 0.0
    %621 = vmatpush1.msra.mxu0 0.0
    %622 = vmatprep.subr.mxu0 0.0
    %623 = vmatpush1.msra.mxu0 0.0
    %624 = vmatprep.subr.mxu0 0.0
    %625 = vmatpush1.msra.mxu0 0.0
    %626 = vmatprep.subr.mxu0 0.0
    %627 = vmatpush1.msra.mxu0 0.0
    %628 = vmatprep.subr.mxu0 0.0
    %629 = vmatpush1.msra.mxu0 0.0
    %630 = vmatprep.subr.mxu0 0.0
    %631 = vmatpush1.msra.mxu0 0.0
    %632 = vmatprep.mubr.f32.mxu0 0.0
    %633 = vmatmul.mubr.f32.gmra.mrb[0].mxu0 %v544
    %v634 = vpop.f32.mrb[0].mxu0
    %v635 = vadd.f32 %v566, %v634
    %v636 = vpop.f32.mrb[0].mxu0
    %637 = vdwg.mxu0
    %v638 = vmul.f32 %v635, %v635
    %639 = vadd.xlane.f32.xlu0 %v638
    %v640 = vpop.xlane.xlu0 %639
    %v641 = vmax.f32 %v640, 1e-24
    %v642 = vrsqrt.pop %v641
    %v643 = vmul.f32 %v635, %v642
    %644 = vst [vmem:[#allocation8] sm:$0xff] %v643
    // Predicated region
    $region34: #{tpu_custom_call.1} parent=1 // pred_check
      _
    $region35: #{tpu_custom_call.1} parent=1 // pred_check_branch
      %646 = sbr.rel (0) target = $region37
    $region36: #{tpu_custom_call.1} parent=1 // pred_region
      %s648 = ssub.s32 128, 128
      %649 = vsyncadd [#allocation4], %s648
      %s651 = sshll.u32 [#allocation8], 4
      %s652 = int_to_ptr.vmem [resolvable:$true] %s651
      %654 = dma.vmem_to_hbm [thread:$0]  %s652, 128, %s5, [#allocation4]
    $region37: #{tpu_custom_call.1} parent=1 // pred_fallthru
      _
    // Predicated region
    $region38: #{tpu_custom_call.1} parent=1 // pred_check
      _
    $region39: #{tpu_custom_call.1} parent=1 // pred_check_branch
      %656 = sbr.rel (0) target = $region41
    $region40: #{tpu_custom_call.1} parent=1 // pred_region
      %657 = dma.done [#allocation4], 128
    $region41: #{tpu_custom_call.1} parent=1 // pred_fallthru
      _
    %658 = vsyncpa [#allocation3], 1
    %659 = vsyncpa [#allocation6], 1
    %660 = vsyncpa [#allocation4], 1

</llo_original>
